<compile_context>
chip_gen: v7x
topology: tpu7x:2x2x1
jax: 0.10.0
libtpu: 0.0.40
codegen_flags: <defaults>
</compile_context>

<pallas_src>
import jax
import jax.numpy as jnp
from jax.experimental import pallas as pl
from jax.experimental.pallas import tpu as pltpu

NEG_SLOPE = 0.01  # PyTorch nn.LeakyReLU default
_LAYER_DIMS = ((4, 2), (2, 2), (2, 4), (4, 3))  # (in_features, out_features)

# Static offsets of (weights, bias) of each layer inside the flat SMEM vector.
_PARAM_OFFSETS = []
_off = 0
for _in_f, _out_f in _LAYER_DIMS:
    _PARAM_OFFSETS.append((_off, _off + _out_f * _in_f))
    _off += _out_f * _in_f + _out_f
_N_PARAMS = _off  # 43


def _cdiv(a, b):
    return -(-a // b)


def _round_up(n, m):
    return _cdiv(n, m) * m


def iris_kernel(x_ref, p_ref, out_ref):
    """Fused 4-layer MLP + argmax on one sublane/lane-dense batch block.

    x_ref:   (4, BT, 128) f32 VMEM -- feature f of sample (blk, lane) at [f, blk, lane]
    p_ref:   (43,) f32 SMEM        -- [w1, b1, w2, b2, w3, b3, w4, b4], W in (out, in) order
    out_ref: (4, BT, 128) f32 VMEM -- rows 0..2 logits, row 3 argmax class as f32
    """
    rows = [x_ref[k] for k in range(4)]  # 4 x (BT, 128), sublane-dense

    for (in_f, out_f), (w_off, b_off) in zip(_LAYER_DIMS, _PARAM_OFFSETS):
        new_rows = []
        for j in range(out_f):                       # static unroll (<= 4)
            acc = rows[0] * p_ref[w_off + j * in_f]  # scalar-broadcast FMA (VPU)
            for k in range(1, in_f):
                acc = acc + rows[k] * p_ref[w_off + j * in_f + k]
            acc = acc + p_ref[b_off + j]
            new_rows.append(jnp.maximum(acc, NEG_SLOPE * acc))  # LeakyReLU
        rows = new_rows

    h0, h1, h2 = rows
    out_ref[0] = h0
    out_ref[1] = h1
    out_ref[2] = h2

    # Fused predict_class: first-max-wins argmax over the 3 class rows,
    # stored as f32 (0., 1., 2.) in row 3 of the same output stream.
    best01 = jnp.maximum(h0, h1)
    cls = (h1 > h0).astype(jnp.float32)
    cls = jnp.where(h2 > best01, jnp.float32(2.0), cls)
    out_ref[3] = cls


def iris_forward(x, params, *, target_steps=8, max_block_rows=1024):
    """x: (N, 4) float. Returns (logits (N, 3) f32, classes (N,) i32)."""
    n, d = x.shape
    assert d == 4, "IRIS expects 4 input features"

    # --- tiling: M lane-blocks of 128 samples, BT blocks per grid step ---
    m = _cdiv(max(n, 1), 128)
    if m <= 8:
        bt = m                         # single full block (block dim == array dim)
        m_pad = m
    else:
        bt = min(_round_up(_cdiv(m, target_steps), 8), max_block_rows)
        m_pad = _round_up(m, bt)       # padding bounded by < one tile
    n_pad = m_pad * 128

    # --- wrapper layout: one pad + one transpose pass into (4, M, 128) ---
    x32 = x.astype(jnp.float32)
    xp = jnp.pad(x32, ((0, n_pad - n), (0, 0)))
    xb = xp.reshape(m_pad, 128, 4).transpose(2, 0, 1)  # (4, M, 128)

    # --- single flat SMEM parameter vector (PyTorch (out, in) row-major) ---
    flat_params = jnp.concatenate(
        [jnp.concatenate([params[f"w{i}"].reshape(-1),
                          params[f"b{i}"].reshape(-1)]) for i in range(1, 5)]
    ).astype(jnp.float32)
    assert flat_params.shape == (_N_PARAMS,)

    out = pl.pallas_call(
        iris_kernel,
        out_shape=jax.ShapeDtypeStruct((4, m_pad, 128), jnp.float32),
        grid=(m_pad // bt,),
        in_specs=[
            pl.BlockSpec((4, bt, 128), lambda i: (0, i, 0)),
            pl.BlockSpec(memory_space=pltpu.MemorySpace.SMEM),
        ],
        out_specs=pl.BlockSpec((4, bt, 128), lambda i: (0, i, 0)),
        compiler_params=pltpu.CompilerParams(
            dimension_semantics=("parallel",),
            vmem_limit_bytes=48 * 1024 * 1024),
    )(xb, flat_params)

    logits = out[:3].transpose(1, 2, 0).reshape(n_pad, 3)[:n]   # (N, 3)
    classes = out[3].reshape(n_pad)[:n].astype(jnp.int32)       # (N,)
    return logits, classes


def init_params(key):
    """Deterministic synthetic init matching nn.Linear shapes: W (out, in), b (out,)."""
    params = {}
    keys = jax.random.split(key, 2 * len(_LAYER_DIMS))
    for i, (fan_in, fan_out) in enumerate(_LAYER_DIMS):
        bound = 1.0 / jnp.sqrt(jnp.float32(fan_in))
        params[f"w{i + 1}"] = jax.random.uniform(
            keys[2 * i], (fan_out, fan_in), minval=-bound, maxval=bound,
            dtype=jnp.float32)
        params[f"b{i + 1}"] = jax.random.uniform(
            keys[2 * i + 1], (fan_out,), minval=-bound, maxval=bound,
            dtype=jnp.float32)
    return params


def iris_reference(x, params):
    h = x.astype(jnp.float32)
    for i in range(1, 5):
        w = params[f"w{i}"]
        b = params[f"b{i}"]
        h = jnp.einsum("ni,oi->no", h, w,
                       precision=jax.lax.Precision.HIGHEST) + b
        h = jnp.maximum(h, NEG_SLOPE * h)
    return h


if __name__ == "__main__":
    key = jax.random.PRNGKey(0)
    pkey, xkey = jax.random.split(key)

    params = init_params(pkey)
    x = jax.random.normal(xkey, (8, 4), dtype=jnp.float32)  # (batch=8, features=4)

    logits, classes = iris_forward(x, params)
    logits = jax.block_until_ready(logits)
    classes = jax.block_until_ready(classes)

    ref_logits = iris_reference(x, params)
    ref_classes = jnp.argmax(ref_logits, axis=1)

    assert logits.shape == (8, 3)
    assert classes.shape == (8,)
    assert jnp.allclose(logits, ref_logits, atol=1e-5, rtol=1e-5), "logits mismatch"
    assert jnp.array_equal(classes, ref_classes), "argmax mismatch"

    print("KERNEL_OK")
</pallas_src>

<mosaic_0001>
module attributes {stable_mosaic.version = 11 : i64} {
  func.func @iris_kernel(%arg0: i32, %arg1: memref<4x1x128xf32, #tpu.memory_space<vmem>>, %arg2: memref<43xf32, #tpu.memory_space<smem>>, %arg3: memref<4x1x128xf32, #tpu.memory_space<vmem>>) attributes {dimension_semantics = [#tpu.dimension_semantics<parallel>], iteration_bounds = array<i64: 1>, scalar_prefetch = 0 : i64, scratch_operands = 0 : i64, tpu.core_type = #tpu.core_type<tc>, window_params = [{transform_indices = @transform_0, window_bounds = array<i64: 4, 1, 128>}, {transform_indices = @transform_1, window_bounds = array<i64: 43>}, {transform_indices = @transform_2, window_bounds = array<i64: 4, 1, 128>}]} {
    %c0 = arith.constant 0 : index
    %c0_0 = arith.constant 0 : index
    %c0_1 = arith.constant 0 : index
    %0 = vector.load %arg1[%c0, %c0_0, %c0_1] : memref<4x1x128xf32, #tpu.memory_space<vmem>>, vector<1x1x128xf32>
    %1 = vector.shape_cast %0 : vector<1x1x128xf32> to vector<1x128xf32>
    %c1 = arith.constant 1 : index
    %c0_2 = arith.constant 0 : index
    %c0_3 = arith.constant 0 : index
    %2 = vector.load %arg1[%c1, %c0_2, %c0_3] : memref<4x1x128xf32, #tpu.memory_space<vmem>>, vector<1x1x128xf32>
    %3 = vector.shape_cast %2 : vector<1x1x128xf32> to vector<1x128xf32>
    %c2 = arith.constant 2 : index
    %c0_4 = arith.constant 0 : index
    %c0_5 = arith.constant 0 : index
    %4 = vector.load %arg1[%c2, %c0_4, %c0_5] : memref<4x1x128xf32, #tpu.memory_space<vmem>>, vector<1x1x128xf32>
    %5 = vector.shape_cast %4 : vector<1x1x128xf32> to vector<1x128xf32>
    %c3 = arith.constant 3 : index
    %c0_6 = arith.constant 0 : index
    %c0_7 = arith.constant 0 : index
    %6 = vector.load %arg1[%c3, %c0_6, %c0_7] : memref<4x1x128xf32, #tpu.memory_space<vmem>>, vector<1x1x128xf32>
    %7 = vector.shape_cast %6 : vector<1x1x128xf32> to vector<1x128xf32>
    %c0_8 = arith.constant 0 : index
    %8 = memref.load %arg2[%c0_8] : memref<43xf32, #tpu.memory_space<smem>>
    %9 = vector.broadcast %8 : f32 to vector<1x128xf32>
    %10 = arith.mulf %1, %9 : vector<1x128xf32>
    %c1_9 = arith.constant 1 : index
    %11 = memref.load %arg2[%c1_9] : memref<43xf32, #tpu.memory_space<smem>>
    %12 = vector.broadcast %11 : f32 to vector<1x128xf32>
    %13 = arith.mulf %3, %12 : vector<1x128xf32>
    %14 = arith.addf %10, %13 : vector<1x128xf32>
    %c2_10 = arith.constant 2 : index
    %15 = memref.load %arg2[%c2_10] : memref<43xf32, #tpu.memory_space<smem>>
    %16 = vector.broadcast %15 : f32 to vector<1x128xf32>
    %17 = arith.mulf %5, %16 : vector<1x128xf32>
    %18 = arith.addf %14, %17 : vector<1x128xf32>
    %c3_11 = arith.constant 3 : index
    %19 = memref.load %arg2[%c3_11] : memref<43xf32, #tpu.memory_space<smem>>
    %20 = vector.broadcast %19 : f32 to vector<1x128xf32>
    %21 = arith.mulf %7, %20 : vector<1x128xf32>
    %22 = arith.addf %18, %21 : vector<1x128xf32>
    %c8 = arith.constant 8 : index
    %23 = memref.load %arg2[%c8] : memref<43xf32, #tpu.memory_space<smem>>
    %24 = vector.broadcast %23 : f32 to vector<1x128xf32>
    %25 = arith.addf %22, %24 : vector<1x128xf32>
    %cst = arith.constant 0.00999999977 : f32
    %26 = vector.broadcast %cst : f32 to vector<1x128xf32>
    %27 = arith.mulf %26, %25 : vector<1x128xf32>
    %28 = arith.maximumf %25, %27 : vector<1x128xf32>
    %c4 = arith.constant 4 : index
    %29 = memref.load %arg2[%c4] : memref<43xf32, #tpu.memory_space<smem>>
    %30 = vector.broadcast %29 : f32 to vector<1x128xf32>
    %31 = arith.mulf %1, %30 : vector<1x128xf32>
    %c5 = arith.constant 5 : index
    %32 = memref.load %arg2[%c5] : memref<43xf32, #tpu.memory_space<smem>>
    %33 = vector.broadcast %32 : f32 to vector<1x128xf32>
    %34 = arith.mulf %3, %33 : vector<1x128xf32>
    %35 = arith.addf %31, %34 : vector<1x128xf32>
    %c6 = arith.constant 6 : index
    %36 = memref.load %arg2[%c6] : memref<43xf32, #tpu.memory_space<smem>>
    %37 = vector.broadcast %36 : f32 to vector<1x128xf32>
    %38 = arith.mulf %5, %37 : vector<1x128xf32>
    %39 = arith.addf %35, %38 : vector<1x128xf32>
    %c7 = arith.constant 7 : index
    %40 = memref.load %arg2[%c7] : memref<43xf32, #tpu.memory_space<smem>>
    %41 = vector.broadcast %40 : f32 to vector<1x128xf32>
    %42 = arith.mulf %7, %41 : vector<1x128xf32>
    %43 = arith.addf %39, %42 : vector<1x128xf32>
    %c9 = arith.constant 9 : index
    %44 = memref.load %arg2[%c9] : memref<43xf32, #tpu.memory_space<smem>>
    %45 = vector.broadcast %44 : f32 to vector<1x128xf32>
    %46 = arith.addf %43, %45 : vector<1x128xf32>
    %cst_12 = arith.constant 0.00999999977 : f32
    %47 = vector.broadcast %cst_12 : f32 to vector<1x128xf32>
    %48 = arith.mulf %47, %46 : vector<1x128xf32>
    %49 = arith.maximumf %46, %48 : vector<1x128xf32>
    %c10 = arith.constant 10 : index
    %50 = memref.load %arg2[%c10] : memref<43xf32, #tpu.memory_space<smem>>
    %51 = vector.broadcast %50 : f32 to vector<1x128xf32>
    %52 = arith.mulf %28, %51 : vector<1x128xf32>
    %c11 = arith.constant 11 : index
    %53 = memref.load %arg2[%c11] : memref<43xf32, #tpu.memory_space<smem>>
    %54 = vector.broadcast %53 : f32 to vector<1x128xf32>
    %55 = arith.mulf %49, %54 : vector<1x128xf32>
    %56 = arith.addf %52, %55 : vector<1x128xf32>
    %c14 = arith.constant 14 : index
    %57 = memref.load %arg2[%c14] : memref<43xf32, #tpu.memory_space<smem>>
    %58 = vector.broadcast %57 : f32 to vector<1x128xf32>
    %59 = arith.addf %56, %58 : vector<1x128xf32>
    %cst_13 = arith.constant 0.00999999977 : f32
    %60 = vector.broadcast %cst_13 : f32 to vector<1x128xf32>
    %61 = arith.mulf %60, %59 : vector<1x128xf32>
    %62 = arith.maximumf %59, %61 : vector<1x128xf32>
    %c12 = arith.constant 12 : index
    %63 = memref.load %arg2[%c12] : memref<43xf32, #tpu.memory_space<smem>>
    %64 = vector.broadcast %63 : f32 to vector<1x128xf32>
    %65 = arith.mulf %28, %64 : vector<1x128xf32>
    %c13 = arith.constant 13 : index
    %66 = memref.load %arg2[%c13] : memref<43xf32, #tpu.memory_space<smem>>
    %67 = vector.broadcast %66 : f32 to vector<1x128xf32>
    %68 = arith.mulf %49, %67 : vector<1x128xf32>
    %69 = arith.addf %65, %68 : vector<1x128xf32>
    %c15 = arith.constant 15 : index
    %70 = memref.load %arg2[%c15] : memref<43xf32, #tpu.memory_space<smem>>
    %71 = vector.broadcast %70 : f32 to vector<1x128xf32>
    %72 = arith.addf %69, %71 : vector<1x128xf32>
    %cst_14 = arith.constant 0.00999999977 : f32
    %73 = vector.broadcast %cst_14 : f32 to vector<1x128xf32>
    %74 = arith.mulf %73, %72 : vector<1x128xf32>
    %75 = arith.maximumf %72, %74 : vector<1x128xf32>
    %c16 = arith.constant 16 : index
    %76 = memref.load %arg2[%c16] : memref<43xf32, #tpu.memory_space<smem>>
    %77 = vector.broadcast %76 : f32 to vector<1x128xf32>
    %78 = arith.mulf %62, %77 : vector<1x128xf32>
    %c17 = arith.constant 17 : index
    %79 = memref.load %arg2[%c17] : memref<43xf32, #tpu.memory_space<smem>>
    %80 = vector.broadcast %79 : f32 to vector<1x128xf32>
    %81 = arith.mulf %75, %80 : vector<1x128xf32>
    %82 = arith.addf %78, %81 : vector<1x128xf32>
    %c24 = arith.constant 24 : index
    %83 = memref.load %arg2[%c24] : memref<43xf32, #tpu.memory_space<smem>>
    %84 = vector.broadcast %83 : f32 to vector<1x128xf32>
    %85 = arith.addf %82, %84 : vector<1x128xf32>
    %cst_15 = arith.constant 0.00999999977 : f32
    %86 = vector.broadcast %cst_15 : f32 to vector<1x128xf32>
    %87 = arith.mulf %86, %85 : vector<1x128xf32>
    %88 = arith.maximumf %85, %87 : vector<1x128xf32>
    %c18 = arith.constant 18 : index
    %89 = memref.load %arg2[%c18] : memref<43xf32, #tpu.memory_space<smem>>
    %90 = vector.broadcast %89 : f32 to vector<1x128xf32>
    %91 = arith.mulf %62, %90 : vector<1x128xf32>
    %c19 = arith.constant 19 : index
    %92 = memref.load %arg2[%c19] : memref<43xf32, #tpu.memory_space<smem>>
    %93 = vector.broadcast %92 : f32 to vector<1x128xf32>
    %94 = arith.mulf %75, %93 : vector<1x128xf32>
    %95 = arith.addf %91, %94 : vector<1x128xf32>
    %c25 = arith.constant 25 : index
    %96 = memref.load %arg2[%c25] : memref<43xf32, #tpu.memory_space<smem>>
    %97 = vector.broadcast %96 : f32 to vector<1x128xf32>
    %98 = arith.addf %95, %97 : vector<1x128xf32>
    %cst_16 = arith.constant 0.00999999977 : f32
    %99 = vector.broadcast %cst_16 : f32 to vector<1x128xf32>
    %100 = arith.mulf %99, %98 : vector<1x128xf32>
    %101 = arith.maximumf %98, %100 : vector<1x128xf32>
    %c20 = arith.constant 20 : index
    %102 = memref.load %arg2[%c20] : memref<43xf32, #tpu.memory_space<smem>>
    %103 = vector.broadcast %102 : f32 to vector<1x128xf32>
    %104 = arith.mulf %62, %103 : vector<1x128xf32>
    %c21 = arith.constant 21 : index
    %105 = memref.load %arg2[%c21] : memref<43xf32, #tpu.memory_space<smem>>
    %106 = vector.broadcast %105 : f32 to vector<1x128xf32>
    %107 = arith.mulf %75, %106 : vector<1x128xf32>
    %108 = arith.addf %104, %107 : vector<1x128xf32>
    %c26 = arith.constant 26 : index
    %109 = memref.load %arg2[%c26] : memref<43xf32, #tpu.memory_space<smem>>
    %110 = vector.broadcast %109 : f32 to vector<1x128xf32>
    %111 = arith.addf %108, %110 : vector<1x128xf32>
    %cst_17 = arith.constant 0.00999999977 : f32
    %112 = vector.broadcast %cst_17 : f32 to vector<1x128xf32>
    %113 = arith.mulf %112, %111 : vector<1x128xf32>
    %114 = arith.maximumf %111, %113 : vector<1x128xf32>
    %c22 = arith.constant 22 : index
    %115 = memref.load %arg2[%c22] : memref<43xf32, #tpu.memory_space<smem>>
    %116 = vector.broadcast %115 : f32 to vector<1x128xf32>
    %117 = arith.mulf %62, %116 : vector<1x128xf32>
    %c23 = arith.constant 23 : index
    %118 = memref.load %arg2[%c23] : memref<43xf32, #tpu.memory_space<smem>>
    %119 = vector.broadcast %118 : f32 to vector<1x128xf32>
    %120 = arith.mulf %75, %119 : vector<1x128xf32>
    %121 = arith.addf %117, %120 : vector<1x128xf32>
    %c27 = arith.constant 27 : index
    %122 = memref.load %arg2[%c27] : memref<43xf32, #tpu.memory_space<smem>>
    %123 = vector.broadcast %122 : f32 to vector<1x128xf32>
    %124 = arith.addf %121, %123 : vector<1x128xf32>
    %cst_18 = arith.constant 0.00999999977 : f32
    %125 = vector.broadcast %cst_18 : f32 to vector<1x128xf32>
    %126 = arith.mulf %125, %124 : vector<1x128xf32>
    %127 = arith.maximumf %124, %126 : vector<1x128xf32>
    %c28 = arith.constant 28 : index
    %128 = memref.load %arg2[%c28] : memref<43xf32, #tpu.memory_space<smem>>
    %129 = vector.broadcast %128 : f32 to vector<1x128xf32>
    %130 = arith.mulf %88, %129 : vector<1x128xf32>
    %c29 = arith.constant 29 : index
    %131 = memref.load %arg2[%c29] : memref<43xf32, #tpu.memory_space<smem>>
    %132 = vector.broadcast %131 : f32 to vector<1x128xf32>
    %133 = arith.mulf %101, %132 : vector<1x128xf32>
    %134 = arith.addf %130, %133 : vector<1x128xf32>
    %c30 = arith.constant 30 : index
    %135 = memref.load %arg2[%c30] : memref<43xf32, #tpu.memory_space<smem>>
    %136 = vector.broadcast %135 : f32 to vector<1x128xf32>
    %137 = arith.mulf %114, %136 : vector<1x128xf32>
    %138 = arith.addf %134, %137 : vector<1x128xf32>
    %c31 = arith.constant 31 : index
    %139 = memref.load %arg2[%c31] : memref<43xf32, #tpu.memory_space<smem>>
    %140 = vector.broadcast %139 : f32 to vector<1x128xf32>
    %141 = arith.mulf %127, %140 : vector<1x128xf32>
    %142 = arith.addf %138, %141 : vector<1x128xf32>
    %c40 = arith.constant 40 : index
    %143 = memref.load %arg2[%c40] : memref<43xf32, #tpu.memory_space<smem>>
    %144 = vector.broadcast %143 : f32 to vector<1x128xf32>
    %145 = arith.addf %142, %144 : vector<1x128xf32>
    %cst_19 = arith.constant 0.00999999977 : f32
    %146 = vector.broadcast %cst_19 : f32 to vector<1x128xf32>
    %147 = arith.mulf %146, %145 : vector<1x128xf32>
    %148 = arith.maximumf %145, %147 : vector<1x128xf32>
    %c32 = arith.constant 32 : index
    %149 = memref.load %arg2[%c32] : memref<43xf32, #tpu.memory_space<smem>>
    %150 = vector.broadcast %149 : f32 to vector<1x128xf32>
    %151 = arith.mulf %88, %150 : vector<1x128xf32>
    %c33 = arith.constant 33 : index
    %152 = memref.load %arg2[%c33] : memref<43xf32, #tpu.memory_space<smem>>
    %153 = vector.broadcast %152 : f32 to vector<1x128xf32>
    %154 = arith.mulf %101, %153 : vector<1x128xf32>
    %155 = arith.addf %151, %154 : vector<1x128xf32>
    %c34 = arith.constant 34 : index
    %156 = memref.load %arg2[%c34] : memref<43xf32, #tpu.memory_space<smem>>
    %157 = vector.broadcast %156 : f32 to vector<1x128xf32>
    %158 = arith.mulf %114, %157 : vector<1x128xf32>
    %159 = arith.addf %155, %158 : vector<1x128xf32>
    %c35 = arith.constant 35 : index
    %160 = memref.load %arg2[%c35] : memref<43xf32, #tpu.memory_space<smem>>
    %161 = vector.broadcast %160 : f32 to vector<1x128xf32>
    %162 = arith.mulf %127, %161 : vector<1x128xf32>
    %163 = arith.addf %159, %162 : vector<1x128xf32>
    %c41 = arith.constant 41 : index
    %164 = memref.load %arg2[%c41] : memref<43xf32, #tpu.memory_space<smem>>
    %165 = vector.broadcast %164 : f32 to vector<1x128xf32>
    %166 = arith.addf %163, %165 : vector<1x128xf32>
    %cst_20 = arith.constant 0.00999999977 : f32
    %167 = vector.broadcast %cst_20 : f32 to vector<1x128xf32>
    %168 = arith.mulf %167, %166 : vector<1x128xf32>
    %169 = arith.maximumf %166, %168 : vector<1x128xf32>
    %c36 = arith.constant 36 : index
    %170 = memref.load %arg2[%c36] : memref<43xf32, #tpu.memory_space<smem>>
    %171 = vector.broadcast %170 : f32 to vector<1x128xf32>
    %172 = arith.mulf %88, %171 : vector<1x128xf32>
    %c37 = arith.constant 37 : index
    %173 = memref.load %arg2[%c37] : memref<43xf32, #tpu.memory_space<smem>>
    %174 = vector.broadcast %173 : f32 to vector<1x128xf32>
    %175 = arith.mulf %101, %174 : vector<1x128xf32>
    %176 = arith.addf %172, %175 : vector<1x128xf32>
    %c38 = arith.constant 38 : index
    %177 = memref.load %arg2[%c38] : memref<43xf32, #tpu.memory_space<smem>>
    %178 = vector.broadcast %177 : f32 to vector<1x128xf32>
    %179 = arith.mulf %114, %178 : vector<1x128xf32>
    %180 = arith.addf %176, %179 : vector<1x128xf32>
    %c39 = arith.constant 39 : index
    %181 = memref.load %arg2[%c39] : memref<43xf32, #tpu.memory_space<smem>>
    %182 = vector.broadcast %181 : f32 to vector<1x128xf32>
    %183 = arith.mulf %127, %182 : vector<1x128xf32>
    %184 = arith.addf %180, %183 : vector<1x128xf32>
    %c42 = arith.constant 42 : index
    %185 = memref.load %arg2[%c42] : memref<43xf32, #tpu.memory_space<smem>>
    %186 = vector.broadcast %185 : f32 to vector<1x128xf32>
    %187 = arith.addf %184, %186 : vector<1x128xf32>
    %cst_21 = arith.constant 0.00999999977 : f32
    %188 = vector.broadcast %cst_21 : f32 to vector<1x128xf32>
    %189 = arith.mulf %188, %187 : vector<1x128xf32>
    %190 = arith.maximumf %187, %189 : vector<1x128xf32>
    %c0_22 = arith.constant 0 : index
    %c0_23 = arith.constant 0 : index
    %c0_24 = arith.constant 0 : index
    %191 = vector.load %arg3[%c0_22, %c0_23, %c0_24] : memref<4x1x128xf32, #tpu.memory_space<vmem>>, vector<1x1x128xf32>
    %192 = vector.shape_cast %191 : vector<1x1x128xf32> to vector<1x128xf32>
    %193 = vector.shape_cast %148 : vector<1x128xf32> to vector<1x1x128xf32>
    tpu.vector_store %arg3[%c0_22, %c0_23, %c0_24], %193 {strides = array<i32>} : memref<4x1x128xf32, #tpu.memory_space<vmem>>, vector<1x1x128xf32>,
    %c1_25 = arith.constant 1 : index
    %c0_26 = arith.constant 0 : index
    %c0_27 = arith.constant 0 : index
    %194 = vector.load %arg3[%c1_25, %c0_26, %c0_27] : memref<4x1x128xf32, #tpu.memory_space<vmem>>, vector<1x1x128xf32>
    %195 = vector.shape_cast %194 : vector<1x1x128xf32> to vector<1x128xf32>
    %196 = vector.shape_cast %169 : vector<1x128xf32> to vector<1x1x128xf32>
    tpu.vector_store %arg3[%c1_25, %c0_26, %c0_27], %196 {strides = array<i32>} : memref<4x1x128xf32, #tpu.memory_space<vmem>>, vector<1x1x128xf32>,
    %c2_28 = arith.constant 2 : index
    %c0_29 = arith.constant 0 : index
    %c0_30 = arith.constant 0 : index
    %197 = vector.load %arg3[%c2_28, %c0_29, %c0_30] : memref<4x1x128xf32, #tpu.memory_space<vmem>>, vector<1x1x128xf32>
    %198 = vector.shape_cast %197 : vector<1x1x128xf32> to vector<1x128xf32>
    %199 = vector.shape_cast %190 : vector<1x128xf32> to vector<1x1x128xf32>
    tpu.vector_store %arg3[%c2_28, %c0_29, %c0_30], %199 {strides = array<i32>} : memref<4x1x128xf32, #tpu.memory_space<vmem>>, vector<1x1x128xf32>,
    %200 = arith.maximumf %148, %169 : vector<1x128xf32>
    %201 = arith.cmpf ogt, %169, %148 : vector<1x128xf32>
    %202 = arith.extui %201 : vector<1x128xi1> to vector<1x128xi32>
    %203 = arith.sitofp %202 : vector<1x128xi32> to vector<1x128xf32>
    %204 = arith.cmpf ogt, %190, %200 : vector<1x128xf32>
    %cst_31 = arith.constant 2.000000e+00 : f32
    %205 = vector.broadcast %cst_31 : f32 to vector<1x128xf32>
    %206 = arith.select %204, %205, %203 : vector<1x128xi1>, vector<1x128xf32>
    %c3_32 = arith.constant 3 : index
    %c0_33 = arith.constant 0 : index
    %c0_34 = arith.constant 0 : index
    %207 = vector.load %arg3[%c3_32, %c0_33, %c0_34] : memref<4x1x128xf32, #tpu.memory_space<vmem>>, vector<1x1x128xf32>
    %208 = vector.shape_cast %207 : vector<1x1x128xf32> to vector<1x128xf32>
    %209 = vector.shape_cast %206 : vector<1x128xf32> to vector<1x1x128xf32>
    tpu.vector_store %arg3[%c3_32, %c0_33, %c0_34], %209 {strides = array<i32>} : memref<4x1x128xf32, #tpu.memory_space<vmem>>, vector<1x1x128xf32>,
    return
  }
  func.func @transform_0(%arg0: i32) -> (i32, i32, i32) {
    %c0_i32 = arith.constant 0 : i32
    %c0_i32_0 = arith.constant 0 : i32
    %c0_i32_1 = arith.constant 0 : i32
    return %c0_i32, %arg0, %c0_i32_0 : i32, i32, i32
  }
  func.func @transform_1(%arg0: i32) -> i32 {
    %c0_i32 = arith.constant 0 : i32
    %c0_i32_0 = arith.constant 0 : i32
    return %c0_i32 : i32
  }
  func.func @transform_2(%arg0: i32) -> (i32, i32, i32) {
    %c0_i32 = arith.constant 0 : i32
    %c0_i32_0 = arith.constant 0 : i32
    %c0_i32_1 = arith.constant 0 : i32
    return %c0_i32, %arg0, %c0_i32_0 : i32, i32, i32
  }
}

</mosaic_0001>

<llo_original>
// kernel: tpu_custom_call.1
$region0: #{tpu_custom_call.1}
  #allocation0 [shape = 'u32[]', space=smem, size = 0x4, offset = 0x4, fixed_abs, tag = 'smem constant byte address 0x4 - core index']
  #allocation1 [shape = 'u32[144,128]{1,0:T(1,128)}', space=vmem, size = 0x12000, scoped, tag = 'internal scratch']
  %s0 = inlined_call_operand.hbm [shape: f32[4,1,128], index: 0, kind: input, shape index: {}]
  %s1 = inlined_call_operand.vmem [shape: f32[43], index: 1, kind: input, shape index: {}]
  %s2 = inlined_call_operand.hbm [shape: f32[4,1,128], index: 2, kind: output, shape index: {}]
  %s3 = sld [smem:[#allocation0]]
  $region26: #{tpu_custom_call.1} parent=0
    _
  %s5 = ssub.s32 1, %s3
  %s6 = scalar_select 0, %s5, %s3
  $region1: #{tpu_custom_call.1} parent=0
    #allocation2 [shape = 'u8[2048]{0}', space=vmem, size = 0x800, scoped, tag = 'input window, operand 0, single buffered']
    #allocation3 [shape = 's32[1]{0}', space=sflag, size = 0x4, scoped, tag = 'scoped memory for tpu_custom_call.1']
    #allocation4 [shape = 's32[1]{0}', space=sflag, size = 0x4, scoped, tag = 'scoped memory for tpu_custom_call.1']
    #allocation5 [shape = 's32[1]{0}', space=sflag, size = 0x4, scoped, tag = 'scoped memory for tpu_custom_call.1']
    #allocation6 [shape = 'u8[512]{0}', space=smem, size = 0x200, scoped, tag = 'input window, operand 1, single buffered']
    #allocation7 [shape = 'u8[2048]{0}', space=vmem, size = 0x800, scoped, tag = 'output window, operand 0, single buffered']
    %7 = vsyncpa [#allocation3], 0
    %8 = vsyncpa [#allocation5], 0
    %9 = vsyncpa [#allocation4], 0
    // Predicated region
    $region2: #{tpu_custom_call.1} parent=1 // pred_check
      _
    $region3: #{tpu_custom_call.1} parent=1 // pred_check_branch
      %11 = sbr.rel (0) target = $region5
    $region4: #{tpu_custom_call.1} parent=1 // pred_region
      %s13 = ssub.s32 64, 64
      %14 = vsyncadd [#allocation3], %s13
      %s15 = sshll.u32 [#allocation2], 4
      %s16 = int_to_ptr.vmem [resolvable:$true] %s15
      %21 = dma.hbm_to_vmem [thread:$0]  %s0, 64, %s16, [#allocation3], 16, 16, 1
    $region5: #{tpu_custom_call.1} parent=1 // pred_fallthru
      _
    // Predicated region
    $region6: #{tpu_custom_call.1} parent=1 // pred_check
      _
    $region7: #{tpu_custom_call.1} parent=1 // pred_check_branch
      %23 = sbr.rel (0) target = $region9
    $region8: #{tpu_custom_call.1} parent=1 // pred_region
      %s25 = ssub.s32 16, 16
      %26 = vsyncadd [#allocation5], %s25
      %s28 = sshll.u32 %s1, 4
      %s29 = int_to_ptr.vmem [resolvable:$true] %s28
      %31 = dma.vmem_to_smem %s29, 16, [#allocation6], [#allocation5]
    $region9: #{tpu_custom_call.1} parent=1 // pred_fallthru
      _
    // Predicated region
    $region10: #{tpu_custom_call.1} parent=1 // pred_check
      _
    $region11: #{tpu_custom_call.1} parent=1 // pred_check_branch
      %33 = sbr.rel (0) target = $region13
    $region12: #{tpu_custom_call.1} parent=1 // pred_region
      %34 = dma.done [#allocation3], 64
    $region13: #{tpu_custom_call.1} parent=1 // pred_fallthru
      _
    // Predicated region
    $region14: #{tpu_custom_call.1} parent=1 // pred_check
      _
    $region15: #{tpu_custom_call.1} parent=1 // pred_check_branch
      %36 = sbr.rel (0) target = $region17
    $region16: #{tpu_custom_call.1} parent=1 // pred_region
      %37 = dma.done [#allocation5], 16
    $region17: #{tpu_custom_call.1} parent=1 // pred_fallthru
      _
    %38 = sfence
    %v39 = vld [vmem:[#allocation2] sm:$0x1]
    %s40 = scalar_lea.vmem [#allocation2], 1
    %v41 = vld [vmem:[%s40] sm:$0x1]
    %s42 = scalar_lea.vmem [#allocation2], 2
    %v43 = vld [vmem:[%s42] sm:$0x1]
    %s44 = scalar_lea.vmem [#allocation2], 3
    %v45 = vld [vmem:[%s44] sm:$0x1]
    %s46 = sld [smem:[#allocation6]]
    %v47 = vstv %s46
    %v48 = vmul.f32 %v39, %v47
    %s49 = sld [smem:[#allocation6 + $0x1]]
    %v50 = vstv %s49
    %v51 = vmul.f32 %v41, %v50
    %v52 = vadd.f32 %v48, %v51
    %s53 = sld [smem:[#allocation6 + $0x2]]
    %v54 = vstv %s53
    %v55 = vmul.f32 %v43, %v54
    %v56 = vadd.f32 %v52, %v55
    %s57 = sld [smem:[#allocation6 + $0x3]]
    %v58 = vstv %s57
    %v59 = vmul.f32 %v45, %v58
    %v60 = vadd.f32 %v56, %v59
    %s61 = sld [smem:[#allocation6 + $0x8]]
    %v62 = vstv %s61
    %v63 = vadd.f32 %v60, %v62
    %v64 = vmul.f32 %v63, 0.01
    %v65 = vmax.f32 %v63, %v64
    %s66 = sld [smem:[#allocation6 + $0x4]]
    %v67 = vstv %s66
    %v68 = vmul.f32 %v39, %v67
    %s69 = sld [smem:[#allocation6 + $0x5]]
    %v70 = vstv %s69
    %v71 = vmul.f32 %v41, %v70
    %v72 = vadd.f32 %v68, %v71
    %s73 = sld [smem:[#allocation6 + $0x6]]
    %v74 = vstv %s73
    %v75 = vmul.f32 %v43, %v74
    %v76 = vadd.f32 %v72, %v75
    %s77 = sld [smem:[#allocation6 + $0x7]]
    %v78 = vstv %s77
    %v79 = vmul.f32 %v45, %v78
    %v80 = vadd.f32 %v76, %v79
    %s81 = sld [smem:[#allocation6 + $0x9]]
    %v82 = vstv %s81
    %v83 = vadd.f32 %v80, %v82
    %v84 = vmul.f32 %v83, 0.01
    %v85 = vmax.f32 %v83, %v84
    %s86 = sld [smem:[#allocation6 + $0xa]]
    %v87 = vstv %s86
    %v88 = vmul.f32 %v65, %v87
    %s89 = sld [smem:[#allocation6 + $0xb]]
    %v90 = vstv %s89
    %v91 = vmul.f32 %v85, %v90
    %v92 = vadd.f32 %v88, %v91
    %s93 = sld [smem:[#allocation6 + $0xe]]
    %v94 = vstv %s93
    %v95 = vadd.f32 %v92, %v94
    %v96 = vmul.f32 %v95, 0.01
    %v97 = vmax.f32 %v95, %v96
    %s98 = sld [smem:[#allocation6 + $0xc]]
    %v99 = vstv %s98
    %v100 = vmul.f32 %v65, %v99
    %s101 = sld [smem:[#allocation6 + $0xd]]
    %v102 = vstv %s101
    %v103 = vmul.f32 %v85, %v102
    %v104 = vadd.f32 %v100, %v103
    %s105 = sld [smem:[#allocation6 + $0xf]]
    %v106 = vstv %s105
    %v107 = vadd.f32 %v104, %v106
    %v108 = vmul.f32 %v107, 0.01
    %v109 = vmax.f32 %v107, %v108
    %s110 = sld [smem:[#allocation6 + $0x10]]
    %v111 = vstv %s110
    %v112 = vmul.f32 %v97, %v111
    %s113 = sld [smem:[#allocation6 + $0x11]]
    %v114 = vstv %s113
    %v115 = vmul.f32 %v109, %v114
    %v116 = vadd.f32 %v112, %v115
    %s117 = sld [smem:[#allocation6 + $0x18]]
    %v118 = vstv %s117
    %v119 = vadd.f32 %v116, %v118
    %v120 = vmul.f32 %v119, 0.01
    %v121 = vmax.f32 %v119, %v120
    %s122 = sld [smem:[#allocation6 + $0x12]]
    %v123 = vstv %s122
    %v124 = vmul.f32 %v97, %v123
    %s125 = sld [smem:[#allocation6 + $0x13]]
    %v126 = vstv %s125
    %v127 = vmul.f32 %v109, %v126
    %v128 = vadd.f32 %v124, %v127
    %s129 = sld [smem:[#allocation6 + $0x19]]
    %v130 = vstv %s129
    %v131 = vadd.f32 %v128, %v130
    %v132 = vmul.f32 %v131, 0.01
    %v133 = vmax.f32 %v131, %v132
    %s134 = sld [smem:[#allocation6 + $0x14]]
    %v135 = vstv %s134
    %v136 = vmul.f32 %v97, %v135
    %s137 = sld [smem:[#allocation6 + $0x15]]
    %v138 = vstv %s137
    %v139 = vmul.f32 %v109, %v138
    %v140 = vadd.f32 %v136, %v139
    %s141 = sld [smem:[#allocation6 + $0x1a]]
    %v142 = vstv %s141
    %v143 = vadd.f32 %v140, %v142
    %v144 = vmul.f32 %v143, 0.01
    %v145 = vmax.f32 %v143, %v144
    %s146 = sld [smem:[#allocation6 + $0x16]]
    %v147 = vstv %s146
    %v148 = vmul.f32 %v97, %v147
    %s149 = sld [smem:[#allocation6 + $0x17]]
    %v150 = vstv %s149
    %v151 = vmul.f32 %v109, %v150
    %v152 = vadd.f32 %v148, %v151
    %s153 = sld [smem:[#allocation6 + $0x1b]]
    %v154 = vstv %s153
    %v155 = vadd.f32 %v152, %v154
    %v156 = vmul.f32 %v155, 0.01
    %v157 = vmax.f32 %v155, %v156
    %s158 = sld [smem:[#allocation6 + $0x1c]]
    %v159 = vstv %s158
    %v160 = vmul.f32 %v121, %v159
    %s161 = sld [smem:[#allocation6 + $0x1d]]
    %v162 = vstv %s161
    %v163 = vmul.f32 %v133, %v162
    %v164 = vadd.f32 %v160, %v163
    %s165 = sld [smem:[#allocation6 + $0x1e]]
    %v166 = vstv %s165
    %v167 = vmul.f32 %v145, %v166
    %v168 = vadd.f32 %v164, %v167
    %s169 = sld [smem:[#allocation6 + $0x1f]]
    %v170 = vstv %s169
    %v171 = vmul.f32 %v157, %v170
    %v172 = vadd.f32 %v168, %v171
    %s173 = sld [smem:[#allocation6 + $0x28]]
    %v174 = vstv %s173
    %v175 = vadd.f32 %v172, %v174
    %v176 = vmul.f32 %v175, 0.01
    %v177 = vmax.f32 %v175, %v176
    %s178 = sld [smem:[#allocation6 + $0x20]]
    %v179 = vstv %s178
    %v180 = vmul.f32 %v121, %v179
    %s181 = sld [smem:[#allocation6 + $0x21]]
    %v182 = vstv %s181
    %v183 = vmul.f32 %v133, %v182
    %v184 = vadd.f32 %v180, %v183
    %s185 = sld [smem:[#allocation6 + $0x22]]
    %v186 = vstv %s185
    %v187 = vmul.f32 %v145, %v186
    %v188 = vadd.f32 %v184, %v187
    %s189 = sld [smem:[#allocation6 + $0x23]]
    %v190 = vstv %s189
    %v191 = vmul.f32 %v157, %v190
    %v192 = vadd.f32 %v188, %v191
    %s193 = sld [smem:[#allocation6 + $0x29]]
    %v194 = vstv %s193
    %v195 = vadd.f32 %v192, %v194
    %v196 = vmul.f32 %v195, 0.01
    %v197 = vmax.f32 %v195, %v196
    %s198 = sld [smem:[#allocation6 + $0x24]]
    %v199 = vstv %s198
    %v200 = vmul.f32 %v121, %v199
    %s201 = sld [smem:[#allocation6 + $0x25]]
    %v202 = vstv %s201
    %v203 = vmul.f32 %v133, %v202
    %v204 = vadd.f32 %v200, %v203
    %s205 = sld [smem:[#allocation6 + $0x26]]
    %v206 = vstv %s205
    %v207 = vmul.f32 %v145, %v206
    %v208 = vadd.f32 %v204, %v207
    %s209 = sld [smem:[#allocation6 + $0x27]]
    %v210 = vstv %s209
    %v211 = vmul.f32 %v157, %v210
    %v212 = vadd.f32 %v208, %v211
    %s213 = sld [smem:[#allocation6 + $0x2a]]
    %v214 = vstv %s213
    %v215 = vadd.f32 %v212, %v214
    %v216 = vmul.f32 %v215, 0.01
    %v217 = vmax.f32 %v215, %v216
    %218 = vst [vmem:[#allocation7] sm:$0x1] %v177
    %s219 = scalar_lea.vmem [#allocation7], 1
    %220 = vst [vmem:[%s219] sm:$0x1] %v197
    %s221 = scalar_lea.vmem [#allocation7], 2
    %222 = vst [vmem:[%s221] sm:$0x1] %v217
    %v223 = vmax.f32 %v177, %v197
    %vm224 = vcmp.gt.f32.partialorder %v197, %v177
    %v225 = vsel %vm224, 1, 0
    %v226 = vcvt.s32.f32 %v225
    %vm227 = vcmp.gt.f32.partialorder %v217, %v223
    %v228 = vsel %vm227, 2.0, %v226
    %s229 = scalar_lea.vmem [#allocation7], 3
    %230 = vst [vmem:[%s229] sm:$0x1] %v228
    // Predicated region
    $region18: #{tpu_custom_call.1} parent=1 // pred_check
      _
    $region19: #{tpu_custom_call.1} parent=1 // pred_check_branch
      %232 = sbr.rel (0) target = $region21
    $region20: #{tpu_custom_call.1} parent=1 // pred_region
      %s234 = ssub.s32 64, 64
      %235 = vsyncadd [#allocation4], %s234
      %s236 = sshll.u32 [#allocation7], 4
      %s237 = int_to_ptr.vmem [resolvable:$true] %s236
      %242 = dma.vmem_to_hbm [thread:$0]  %s237, 64, %s2, [#allocation4], 16, 16, 1
    $region21: #{tpu_custom_call.1} parent=1 // pred_fallthru
      _
    // Predicated region
    $region22: #{tpu_custom_call.1} parent=1 // pred_check
      _
    $region23: #{tpu_custom_call.1} parent=1 // pred_check_branch
      %244 = sbr.rel (0) target = $region25
    $region24: #{tpu_custom_call.1} parent=1 // pred_region
      %245 = dma.done [#allocation4], 64
    $region25: #{tpu_custom_call.1} parent=1 // pred_fallthru
      _
    %246 = vsyncpa [#allocation3], 1
    %247 = vsyncpa [#allocation4], 1
    %248 = vsyncpa [#allocation5], 1

</llo_original>
